<compile_context>
chip_gen: v6e
topology: v6e:2x2x1
jax: 0.10.0
libtpu: 0.0.40
codegen_flags: <defaults>
</compile_context>

<pallas_src>
import functools

import jax
import jax.numpy as jnp
from jax.experimental import pallas as pl
from jax.experimental.pallas import tpu as pltpu


def _round_up(x, m):
    return (x + m - 1) // m * m


def _vmem_capacity_bytes(default=64 * 1024 * 1024):
    """Physical VMEM per TensorCore; conservative fallback if query fails."""
    try:
        info = pltpu.get_tpu_info()
        for attr in ("vmem_capacity_bytes", "vmem_bytes", "vmem_size_bytes"):
            val = getattr(info, attr, None)
            if val:
                return int(val)
    except Exception:
        pass
    return default


def _crop_kernel_flat(x_ref, o_ref, *, W, Ho, Wo, r, c):
    # x_ref: (tb, H*W)  lane-dense input block.
    # o_ref: (tb, Ho*Wo) lane-dense output block.
    # Static row loop: each output row is a contiguous lane slice of both the
    # (flattened) source and destination — pure slicing, no relayout ops.
    for h in range(Ho):
        src = (r + h) * W + c
        o_ref[:, h * Wo:(h + 1) * Wo] = x_ref[:, src:src + Wo]


def _crop_kernel_3d(x_ref, o_ref, *, r, c):
    # x_ref: (tb, H, W); o_ref: (tb, H-2r, W-2c).  Used when W >= 128 (already
    # reasonably lane-dense), keeping the crop a single static slice.
    H, W = x_ref.shape[1], x_ref.shape[2]
    o_ref[...] = x_ref[:, r:H - r, c:W - c]


def crop_layer(x, crop_set, *, vmem_budget_bytes=None):
    """Pallas equivalent of CropLayer(crop_set).forward(x) for NCHW input."""
    rows_to_crop = -crop_set[0]
    cols_to_crop = -crop_set[1]
    # PyTorch's `a:-a` slice with a == 0 silently yields an empty tensor; this
    # implementation deliberately rejects that degenerate case instead.
    assert rows_to_crop > 0 and cols_to_crop > 0, (
        "rows/cols to crop must be > 0")

    N, C, H, W = x.shape
    Ho = H - 2 * rows_to_crop
    Wo = W - 2 * cols_to_crop
    assert Ho > 0 and Wo > 0
    NC = N * C

    itemsize = jnp.dtype(x.dtype).itemsize
    sub = max(8, 32 // itemsize)  # sublane multiple: 8 f32 / 16 bf16 / 32 int8

    # Generation-aware VMEM budget for the double-buffered in+out blocks.
    vmem_phys = _vmem_capacity_bytes()
    if vmem_budget_bytes is None:
        vmem_budget_bytes = min(vmem_phys // 2, 64 * 1024 * 1024)

    flat = W < 128  # lane-dense flattened path for narrow images

    # Padded per-plane VMEM footprint (what Mosaic actually allocates).
    if flat:
        in_plane = _round_up(H * W, 128) * itemsize
        out_plane = _round_up(Ho * Wo, 128) * itemsize
    else:
        in_plane = _round_up(H, sub) * _round_up(W, 128) * itemsize
        out_plane = _round_up(Ho, sub) * _round_up(Wo, 128) * itemsize

    # Double-buffered input + output blocks must fit the budget.
    tb = max(1, vmem_budget_bytes // (2 * (in_plane + out_plane)))
    tb = int(min(tb, NC))

    # Keep >= ~8 grid steps (megacore sharding on v7x + pipeline depth) as long
    # as that keeps blocks at least a few hundred KiB.
    tb_steps = pl.cdiv(NC, 8)
    if tb_steps * (in_plane + out_plane) >= 512 * 1024:
        tb = min(tb, tb_steps)

    if flat and tb < NC:
        # Sublane-align the leading (second-to-last) block dim of the flat path.
        tb = max(min(NC, sub), (tb // sub) * sub)

    grid = (pl.cdiv(NC, tb),)

    # Actual double-buffered footprint for the chosen tb; the scoped-VMEM limit
    # adds compiler headroom but never exceeds ~85% of physical VMEM.
    if flat:
        block_bytes = _round_up(tb, sub) * (in_plane + out_plane)
    else:
        block_bytes = tb * (in_plane + out_plane)
    vmem_limit = int(min(vmem_phys * 0.85,
                         2 * block_bytes + 32 * 1024 * 1024))

    bytes_accessed = NC * (H * W + Ho * Wo) * itemsize
    cost = pl.CostEstimate(flops=0, transcendentals=0,
                           bytes_accessed=bytes_accessed)
    cparams = pltpu.CompilerParams(dimension_semantics=("parallel",),
                                   vmem_limit_bytes=vmem_limit)

    if flat:
        x2 = x.reshape(NC, H * W)  # free reshape: NCHW is contiguous
        kernel = functools.partial(_crop_kernel_flat, W=W, Ho=Ho, Wo=Wo,
                                   r=rows_to_crop, c=cols_to_crop)
        out2 = pl.pallas_call(
            kernel,
            out_shape=jax.ShapeDtypeStruct((NC, Ho * Wo), x.dtype),
            grid=grid,
            in_specs=[pl.BlockSpec((tb, H * W), lambda i: (i, 0))],
            out_specs=pl.BlockSpec((tb, Ho * Wo), lambda i: (i, 0)),
            compiler_params=cparams,
            cost_estimate=cost,
        )(x2)
    else:
        x2 = x.reshape(NC, H, W)
        kernel = functools.partial(_crop_kernel_3d,
                                   r=rows_to_crop, c=cols_to_crop)
        out2 = pl.pallas_call(
            kernel,
            out_shape=jax.ShapeDtypeStruct((NC, Ho, Wo), x.dtype),
            grid=grid,
            in_specs=[pl.BlockSpec((tb, H, W), lambda i: (i, 0, 0))],
            out_specs=pl.BlockSpec((tb, Ho, Wo), lambda i: (i, 0, 0)),
            compiler_params=cparams,
            cost_estimate=cost,
        )(x2)

    return out2.reshape(N, C, Ho, Wo)


if __name__ == "__main__":
    key = jax.random.PRNGKey(0)
    # Small NCHW input consistent with a conv-style feature map.
    x = jax.random.normal(key, (2, 4, 16, 16), dtype=jnp.float32)

    crop_set = (-1, -1)  # -> rows_to_crop = cols_to_crop = 1
    out = crop_layer(x, crop_set)
    out = jax.block_until_ready(out)

    # Reference: plain slice, identical to PyTorch input[:, :, 1:-1, 1:-1]
    ref = x[:, :, 1:-1, 1:-1]
    assert out.shape == (2, 4, 14, 14), out.shape
    assert jnp.array_equal(out, ref), "mismatch vs reference slice"

    print("KERNEL_OK")
</pallas_src>

<mosaic_0001>
module attributes {stable_mosaic.version = 11 : i64} {
  func.func @_crop_kernel_flat(%arg0: i32, %arg1: memref<8x256xf32, #tpu.memory_space<vmem>>, %arg2: memref<8x196xf32, #tpu.memory_space<vmem>>) attributes {dimension_semantics = [#tpu.dimension_semantics<parallel>], iteration_bounds = array<i64: 1>, scalar_prefetch = 0 : i64, scratch_operands = 0 : i64, tpu.core_type = #tpu.core_type<tc>, window_params = [{transform_indices = @transform_0, window_bounds = array<i64: 8, 256>}, {transform_indices = @transform_1, window_bounds = array<i64: 8, 196>}]} {
    %c0 = arith.constant 0 : index
    %c17 = arith.constant 17 : index
    %0 = vector.load %arg1[%c0, %c17] : memref<8x256xf32, #tpu.memory_space<vmem>>, vector<8x14xf32>
    %c0_0 = arith.constant 0 : index
    %c0_1 = arith.constant 0 : index
    %1 = vector.load %arg2[%c0_0, %c0_1] : memref<8x196xf32, #tpu.memory_space<vmem>>, vector<8x14xf32>
    tpu.vector_store %arg2[%c0_0, %c0_1], %0 {strides = array<i32>} : memref<8x196xf32, #tpu.memory_space<vmem>>, vector<8x14xf32>,
    %c0_2 = arith.constant 0 : index
    %c33 = arith.constant 33 : index
    %2 = vector.load %arg1[%c0_2, %c33] : memref<8x256xf32, #tpu.memory_space<vmem>>, vector<8x14xf32>
    %c0_3 = arith.constant 0 : index
    %c14 = arith.constant 14 : index
    %3 = vector.load %arg2[%c0_3, %c14] : memref<8x196xf32, #tpu.memory_space<vmem>>, vector<8x14xf32>
    tpu.vector_store %arg2[%c0_3, %c14], %2 {strides = array<i32>} : memref<8x196xf32, #tpu.memory_space<vmem>>, vector<8x14xf32>,
    %c0_4 = arith.constant 0 : index
    %c49 = arith.constant 49 : index
    %4 = vector.load %arg1[%c0_4, %c49] : memref<8x256xf32, #tpu.memory_space<vmem>>, vector<8x14xf32>
    %c0_5 = arith.constant 0 : index
    %c28 = arith.constant 28 : index
    %5 = vector.load %arg2[%c0_5, %c28] : memref<8x196xf32, #tpu.memory_space<vmem>>, vector<8x14xf32>
    tpu.vector_store %arg2[%c0_5, %c28], %4 {strides = array<i32>} : memref<8x196xf32, #tpu.memory_space<vmem>>, vector<8x14xf32>,
    %c0_6 = arith.constant 0 : index
    %c65 = arith.constant 65 : index
    %6 = vector.load %arg1[%c0_6, %c65] : memref<8x256xf32, #tpu.memory_space<vmem>>, vector<8x14xf32>
    %c0_7 = arith.constant 0 : index
    %c42 = arith.constant 42 : index
    %7 = vector.load %arg2[%c0_7, %c42] : memref<8x196xf32, #tpu.memory_space<vmem>>, vector<8x14xf32>
    tpu.vector_store %arg2[%c0_7, %c42], %6 {strides = array<i32>} : memref<8x196xf32, #tpu.memory_space<vmem>>, vector<8x14xf32>,
    %c0_8 = arith.constant 0 : index
    %c81 = arith.constant 81 : index
    %8 = vector.load %arg1[%c0_8, %c81] : memref<8x256xf32, #tpu.memory_space<vmem>>, vector<8x14xf32>
    %c0_9 = arith.constant 0 : index
    %c56 = arith.constant 56 : index
    %9 = vector.load %arg2[%c0_9, %c56] : memref<8x196xf32, #tpu.memory_space<vmem>>, vector<8x14xf32>
    tpu.vector_store %arg2[%c0_9, %c56], %8 {strides = array<i32>} : memref<8x196xf32, #tpu.memory_space<vmem>>, vector<8x14xf32>,
    %c0_10 = arith.constant 0 : index
    %c97 = arith.constant 97 : index
    %10 = vector.load %arg1[%c0_10, %c97] : memref<8x256xf32, #tpu.memory_space<vmem>>, vector<8x14xf32>
    %c0_11 = arith.constant 0 : index
    %c70 = arith.constant 70 : index
    %11 = vector.load %arg2[%c0_11, %c70] : memref<8x196xf32, #tpu.memory_space<vmem>>, vector<8x14xf32>
    tpu.vector_store %arg2[%c0_11, %c70], %10 {strides = array<i32>} : memref<8x196xf32, #tpu.memory_space<vmem>>, vector<8x14xf32>,
    %c0_12 = arith.constant 0 : index
    %c113 = arith.constant 113 : index
    %12 = vector.load %arg1[%c0_12, %c113] : memref<8x256xf32, #tpu.memory_space<vmem>>, vector<8x14xf32>
    %c0_13 = arith.constant 0 : index
    %c84 = arith.constant 84 : index
    %13 = vector.load %arg2[%c0_13, %c84] : memref<8x196xf32, #tpu.memory_space<vmem>>, vector<8x14xf32>
    tpu.vector_store %arg2[%c0_13, %c84], %12 {strides = array<i32>} : memref<8x196xf32, #tpu.memory_space<vmem>>, vector<8x14xf32>,
    %c0_14 = arith.constant 0 : index
    %c129 = arith.constant 129 : index
    %14 = vector.load %arg1[%c0_14, %c129] : memref<8x256xf32, #tpu.memory_space<vmem>>, vector<8x14xf32>
    %c0_15 = arith.constant 0 : index
    %c98 = arith.constant 98 : index
    %15 = vector.load %arg2[%c0_15, %c98] : memref<8x196xf32, #tpu.memory_space<vmem>>, vector<8x14xf32>
    tpu.vector_store %arg2[%c0_15, %c98], %14 {strides = array<i32>} : memref<8x196xf32, #tpu.memory_space<vmem>>, vector<8x14xf32>,
    %c0_16 = arith.constant 0 : index
    %c145 = arith.constant 145 : index
    %16 = vector.load %arg1[%c0_16, %c145] : memref<8x256xf32, #tpu.memory_space<vmem>>, vector<8x14xf32>
    %c0_17 = arith.constant 0 : index
    %c112 = arith.constant 112 : index
    %17 = vector.load %arg2[%c0_17, %c112] : memref<8x196xf32, #tpu.memory_space<vmem>>, vector<8x14xf32>
    tpu.vector_store %arg2[%c0_17, %c112], %16 {strides = array<i32>} : memref<8x196xf32, #tpu.memory_space<vmem>>, vector<8x14xf32>,
    %c0_18 = arith.constant 0 : index
    %c161 = arith.constant 161 : index
    %18 = vector.load %arg1[%c0_18, %c161] : memref<8x256xf32, #tpu.memory_space<vmem>>, vector<8x14xf32>
    %c0_19 = arith.constant 0 : index
    %c126 = arith.constant 126 : index
    %19 = vector.load %arg2[%c0_19, %c126] : memref<8x196xf32, #tpu.memory_space<vmem>>, vector<8x14xf32>
    tpu.vector_store %arg2[%c0_19, %c126], %18 {strides = array<i32>} : memref<8x196xf32, #tpu.memory_space<vmem>>, vector<8x14xf32>,
    %c0_20 = arith.constant 0 : index
    %c177 = arith.constant 177 : index
    %20 = vector.load %arg1[%c0_20, %c177] : memref<8x256xf32, #tpu.memory_space<vmem>>, vector<8x14xf32>
    %c0_21 = arith.constant 0 : index
    %c140 = arith.constant 140 : index
    %21 = vector.load %arg2[%c0_21, %c140] : memref<8x196xf32, #tpu.memory_space<vmem>>, vector<8x14xf32>
    tpu.vector_store %arg2[%c0_21, %c140], %20 {strides = array<i32>} : memref<8x196xf32, #tpu.memory_space<vmem>>, vector<8x14xf32>,
    %c0_22 = arith.constant 0 : index
    %c193 = arith.constant 193 : index
    %22 = vector.load %arg1[%c0_22, %c193] : memref<8x256xf32, #tpu.memory_space<vmem>>, vector<8x14xf32>
    %c0_23 = arith.constant 0 : index
    %c154 = arith.constant 154 : index
    %23 = vector.load %arg2[%c0_23, %c154] : memref<8x196xf32, #tpu.memory_space<vmem>>, vector<8x14xf32>
    tpu.vector_store %arg2[%c0_23, %c154], %22 {strides = array<i32>} : memref<8x196xf32, #tpu.memory_space<vmem>>, vector<8x14xf32>,
    %c0_24 = arith.constant 0 : index
    %c209 = arith.constant 209 : index
    %24 = vector.load %arg1[%c0_24, %c209] : memref<8x256xf32, #tpu.memory_space<vmem>>, vector<8x14xf32>
    %c0_25 = arith.constant 0 : index
    %c168 = arith.constant 168 : index
    %25 = vector.load %arg2[%c0_25, %c168] : memref<8x196xf32, #tpu.memory_space<vmem>>, vector<8x14xf32>
    tpu.vector_store %arg2[%c0_25, %c168], %24 {strides = array<i32>} : memref<8x196xf32, #tpu.memory_space<vmem>>, vector<8x14xf32>,
    %c0_26 = arith.constant 0 : index
    %c225 = arith.constant 225 : index
    %26 = vector.load %arg1[%c0_26, %c225] : memref<8x256xf32, #tpu.memory_space<vmem>>, vector<8x14xf32>
    %c0_27 = arith.constant 0 : index
    %c182 = arith.constant 182 : index
    %27 = vector.load %arg2[%c0_27, %c182] : memref<8x196xf32, #tpu.memory_space<vmem>>, vector<8x14xf32>
    tpu.vector_store %arg2[%c0_27, %c182], %26 {strides = array<i32>} : memref<8x196xf32, #tpu.memory_space<vmem>>, vector<8x14xf32>,
    return
  }
  func.func @transform_0(%arg0: i32) -> (i32, i32) {
    %c0_i32 = arith.constant 0 : i32
    %c0_i32_0 = arith.constant 0 : i32
    return %arg0, %c0_i32 : i32, i32
  }
  func.func @transform_1(%arg0: i32) -> (i32, i32) {
    %c0_i32 = arith.constant 0 : i32
    %c0_i32_0 = arith.constant 0 : i32
    return %arg0, %c0_i32 : i32, i32
  }
}

</mosaic_0001>

<llo_original>
// kernel: tpu_custom_call.1
$region0: #{tpu_custom_call.1}
  #allocation0 [shape = 'u32[]', space=smem, size = 0x4, offset = 0x4, fixed_abs, tag = 'smem constant byte address 0x4 - core index']
  #allocation1 [shape = 'u32[144,128]{1,0:T(1,128)}', space=vmem, size = 0x12000, scoped, tag = 'internal scratch']
  %s0 = inlined_call_operand.hbm [shape: f32[8,256], index: 0, kind: input, shape index: {}]
  %s1 = inlined_call_operand.hbm [shape: f32[8,196], index: 1, kind: output, shape index: {}]
  %s2 = sld [smem:[#allocation0]]
  $region18: #{tpu_custom_call.1} parent=0
    _
  %s4 = ssub.s32 1, %s2
  %s5 = scalar_select 0, %s4, %s2
  $region1: #{tpu_custom_call.1} parent=0
    #allocation2 [shape = 'u8[8192]{0}', space=vmem, size = 0x2000, scoped, tag = 'input window, operand 0, single buffered']
    #allocation3 [shape = 's32[1]{0}', space=sflag, size = 0x4, scoped, tag = 'scoped memory for tpu_custom_call.1']
    #allocation4 [shape = 's32[1]{0}', space=sflag, size = 0x4, scoped, tag = 'scoped memory for tpu_custom_call.1']
    #allocation5 [shape = 'u8[8192]{0}', space=vmem, size = 0x2000, scoped, tag = 'output window, operand 0, single buffered']
    %6 = vsyncpa [#allocation3], 0
    %7 = vsyncpa [#allocation4], 0
    // Predicated region
    $region2: #{tpu_custom_call.1} parent=1 // pred_check
      _
    $region3: #{tpu_custom_call.1} parent=1 // pred_check_branch
      %9 = sbr.rel (0) target = $region5
    $region4: #{tpu_custom_call.1} parent=1 // pred_region
      %s11 = ssub.s32 256, 256
      %12 = vsyncadd [#allocation3], %s11
      %s14 = sshll.u32 [#allocation2], 4
      %s15 = int_to_ptr.vmem [resolvable:$true] %s14
      %17 = dma.hbm_to_vmem [thread:$0]  %s0, 256, %s15, [#allocation3]
    $region5: #{tpu_custom_call.1} parent=1 // pred_fallthru
      _
    // Predicated region
    $region6: #{tpu_custom_call.1} parent=1 // pred_check
      _
    $region7: #{tpu_custom_call.1} parent=1 // pred_check_branch
      %19 = sbr.rel (0) target = $region9
    $region8: #{tpu_custom_call.1} parent=1 // pred_region
      %20 = dma.done [#allocation3], 256
    $region9: #{tpu_custom_call.1} parent=1 // pred_fallthru
      _
    %v21 = vld [vmem:[#allocation2] sm:$0xff]
    %23 = vrot.lane.b32.xlu0 %v21, 111
    %v24 = vpop.permute.xlu0 %23
    %vm26 = vcmask 113664
    %27 = vst.msk [vmem:[#allocation5] sm:$0xff] %vm26, %v24
    %v28 = vld [vmem:[#allocation2] sm:$0xff]
    %30 = vrot.lane.b32.xlu0 %v28, 109
    %v31 = vpop.permute.xlu0 %30
    %vm33 = vcmask 228464
    %34 = vst.msk [vmem:[#allocation5] sm:$0xff] %vm33, %v31
    %v35 = vld [vmem:[#allocation2] sm:$0xff]
    %37 = vrot.lane.b32.xlu0 %v35, 107
    %v38 = vpop.permute.xlu0 %37
    %vm40 = vcmask 343264
    %41 = vst.msk [vmem:[#allocation5] sm:$0xff] %vm40, %v38
    %v42 = vld [vmem:[#allocation2] sm:$0xff]
    %44 = vrot.lane.b32.xlu0 %v42, 105
    %v45 = vpop.permute.xlu0 %44
    %vm47 = vcmask 458064
    %48 = vst.msk [vmem:[#allocation5] sm:$0xff] %vm47, %v45
    %v49 = vld [vmem:[#allocation2] sm:$0xff]
    %51 = vrot.lane.b32.xlu0 %v49, 103
    %v52 = vpop.permute.xlu0 %51
    %vm54 = vcmask 572864
    %55 = vst.msk [vmem:[#allocation5] sm:$0xff] %vm54, %v52
    %v56 = vld [vmem:[#allocation2] sm:$0xff]
    %58 = vrot.lane.b32.xlu0 %v56, 101
    %v59 = vpop.permute.xlu0 %58
    %vm61 = vcmask 687664
    %62 = vst.msk [vmem:[#allocation5] sm:$0xff] %vm61, %v59
    %v63 = vld [vmem:[#allocation2] sm:$0xff]
    %65 = vrot.lane.b32.xlu0 %v63, 99
    %v66 = vpop.permute.xlu0 %65
    %vm68 = vcmask 802464
    %69 = vst.msk [vmem:[#allocation5] sm:$0xff] %vm68, %v66
    %v70 = vld [vmem:[#allocation2 + $0x8] sm:$0xff]
    %72 = vrot.lane.b32.xlu0 %v70, 97
    %v73 = vpop.permute.xlu0 %72
    %vm75 = vcmask 917264
    %76 = vst.msk [vmem:[#allocation5] sm:$0xff] %vm75, %v73
    %v77 = vld [vmem:[#allocation2 + $0x8] sm:$0xff]
    %79 = vrot.lane.b32.xlu0 %v77, 95
    %v80 = vpop.permute.xlu0 %79
    %vm82 = vcmask 1032064
    %83 = vst.msk [vmem:[#allocation5] sm:$0xff] %vm82, %v80
    %v84 = vld [vmem:[#allocation2 + $0x8] sm:$0xff]
    %86 = vrot.lane.b32.xlu0 %v84, 93
    %v87 = vpop.permute.xlu0 %86
    %vm89 = vcmask 1048560
    %90 = vst.msk [vmem:[#allocation5] sm:$0xff] %vm89, %v87
    %vm91 = vcmask 97280
    %92 = vst.msk [vmem:[#allocation5 + $0x8] sm:$0xff] %vm91, %v87
    %v93 = vld [vmem:[#allocation2 + $0x8] sm:$0xff]
    %95 = vrot.lane.b32.xlu0 %v93, 91
    %v96 = vpop.permute.xlu0 %95
    %vm98 = vcmask 212064
    %99 = vst.msk [vmem:[#allocation5 + $0x8] sm:$0xff] %vm98, %v96
    %v100 = vld [vmem:[#allocation2 + $0x8] sm:$0xff]
    %102 = vrot.lane.b32.xlu0 %v100, 89
    %v103 = vpop.permute.xlu0 %102
    %vm105 = vcmask 326864
    %106 = vst.msk [vmem:[#allocation5 + $0x8] sm:$0xff] %vm105, %v103
    %v107 = vld [vmem:[#allocation2 + $0x8] sm:$0xff]
    %109 = vrot.lane.b32.xlu0 %v107, 87
    %v110 = vpop.permute.xlu0 %109
    %vm112 = vcmask 441664
    %113 = vst.msk [vmem:[#allocation5 + $0x8] sm:$0xff] %vm112, %v110
    %v114 = vld [vmem:[#allocation2 + $0x8] sm:$0xff]
    %116 = vrot.lane.b32.xlu0 %v114, 85
    %v117 = vpop.permute.xlu0 %116
    %vm119 = vcmask 556464
    %120 = vst.msk [vmem:[#allocation5 + $0x8] sm:$0xff] %vm119, %v117
    // Predicated region
    $region10: #{tpu_custom_call.1} parent=1 // pred_check
      _
    $region11: #{tpu_custom_call.1} parent=1 // pred_check_branch
      %122 = sbr.rel (0) target = $region13
    $region12: #{tpu_custom_call.1} parent=1 // pred_region
      %s124 = ssub.s32 256, 256
      %125 = vsyncadd [#allocation4], %s124
      %s127 = sshll.u32 [#allocation5], 4
      %s128 = int_to_ptr.vmem [resolvable:$true] %s127
      %130 = dma.vmem_to_hbm [thread:$0]  %s128, 256, %s1, [#allocation4]
    $region13: #{tpu_custom_call.1} parent=1 // pred_fallthru
      _
    // Predicated region
    $region14: #{tpu_custom_call.1} parent=1 // pred_check
      _
    $region15: #{tpu_custom_call.1} parent=1 // pred_check_branch
      %132 = sbr.rel (0) target = $region17
    $region16: #{tpu_custom_call.1} parent=1 // pred_region
      %133 = dma.done [#allocation4], 256
    $region17: #{tpu_custom_call.1} parent=1 // pred_fallthru
      _
    %134 = vsyncpa [#allocation3], 1
    %135 = vsyncpa [#allocation4], 1

</llo_original>
